<compile_context>
chip_gen: v7x
topology: tpu7x:2x2x1
jax: 0.10.0
libtpu: 0.0.40
codegen_flags: <defaults>
</compile_context>

<pallas_src>
import jax
import jax.numpy as jnp
from jax.experimental import pallas as pl
from jax.experimental.pallas import tpu as pltpu

B = 2     # batch
H = 32    # hidden_size == query_size (required by `query + proj_keys`)
DK = 16   # key_size
KB = 64   # kb_max[0] == kb_total == current kb size (pad_keys=False)
L = 2     # GRU num_layers

_VMEM = pl.BlockSpec(memory_space=pltpu.MemorySpace.VMEM)


# --------------------------- Pallas kernels ---------------------------------

def _key_proj_kernel(keys_t_ref, wk_ref, out_ref):
    # keys_t_ref: (DK, B*KB) f32, wk_ref: (H, DK) f32, out_ref: (H, B*KB) f32
    # Pre-computed once per KB -> keep full f32 precision here.
    out_ref[...] = jnp.dot(wk_ref[...], keys_t_ref[...],
                           preferred_element_type=jnp.float32)


def _fused_forward_kernel(q_ref, util_ref, h_ref, pkT_ref, qbT_ref,
                          wu0_ref, gw_ref, bc_ref, bhn_ref,
                          attw_ref, energy_ref,
                          u_out_ref, hnew_ref, pq_ref):
    # q_ref    : (B, H)        query (seq squeezed), f32
    # util_ref : (B, KB)       prev_kb_utilities (seq squeezed), f32
    # h_ref    : (L, B, H)     previous GRU hidden, f32 (aliased with hnew_ref)
    # pkT_ref  : (H, B*KB)     pre-computed proj_keys, transposed layout, f32
    # qbT_ref  : (H, B*KB)     query broadcast/transposed (wrapper-built), f32
    # wu0_ref  : (KB, 3H)      layer-0 W_ih utilities slice, stacked gates, bf16
    # gw_ref   : (4, H, 3H)    [wq0, whh0, wih1, whh1] stacked gates, bf16
    # bc_ref   : (L, 1, 3H)    combined bias: [b_ir+b_hr, b_iz+b_hz, b_in], f32
    # bhn_ref  : (L, 1, H)     b_hn (stays inside the r* term), f32
    # attw_ref : (2, H, H)     [W2, query_layer.weight.T], bf16
    # energy_ref: (1, H)       energy_layer.weight, bf16
    # outputs  : u_out_ref (1, B*KB), hnew_ref (L, B, H), pq_ref (B, H)
    f32 = jnp.float32
    bf16 = jnp.bfloat16

    q_bf = q_ref[...].astype(bf16)                   # (B, H)
    util_bf = util_ref[...].astype(bf16)             # (B, KB)

    # ---- GRU (L layers, seq_len == 1), PyTorch gate order r, z, n ----------
    # One stacked matmul per (layer, operand); gate math stays f32.
    x = None
    for l in range(L):
        h_prev = h_ref[l]                            # (B, H) f32
        if l == 0:
            # feed_input = [utilities, query] without materializing the concat
            gi = (jnp.dot(util_bf, wu0_ref[...], preferred_element_type=f32)
                  + jnp.dot(q_bf, gw_ref[0], preferred_element_type=f32))
        else:
            gi = jnp.dot(x.astype(bf16), gw_ref[2 * l],
                         preferred_element_type=f32)
        gi = gi + bc_ref[l]                          # (B, 3H), b_hh(r,z) folded
        gh = jnp.dot(h_prev.astype(bf16), gw_ref[2 * l + 1],
                     preferred_element_type=f32)     # (B, 3H), no bias
        r = jax.nn.sigmoid(gi[:, 0:H] + gh[:, 0:H])
        z = jax.nn.sigmoid(gi[:, H:2 * H] + gh[:, H:2 * H])
        n = jnp.tanh(gi[:, 2 * H:3 * H] + r * (gh[:, 2 * H:3 * H] + bhn_ref[l]))
        x = (1.0 - z) * n + z * h_prev               # new hidden, (B, H) f32
        hnew_ref[l] = x

    # ---- proj_query (module side-effect: query_layer(kb_feed_hidden[-1])) --
    pq_ref[...] = jnp.dot(x.astype(bf16), attw_ref[1],
                          preferred_element_type=f32)

    # ---- attention energies, lane-dense (H, B*KB) layout --------------------
    # u = energy( tanh( W2( tanh(query + proj_keys) ) ) )
    s = jnp.tanh(qbT_ref[...] + pkT_ref[...])        # (H, B*KB) f32, full lanes
    s2 = jnp.tanh(jnp.dot(attw_ref[0], s.astype(bf16),
                          preferred_element_type=f32))       # (H, B*KB)
    u_out_ref[...] = jnp.dot(energy_ref[...], s2.astype(bf16),
                             preferred_element_type=f32)     # (1, B*KB)


# --------------------------- parameter packing --------------------------------

def pack_params(params):
    """Pre-transpose / pre-stack / pre-cast all weights ONCE (outside jit trace)."""
    bf16 = jnp.bfloat16

    def stacked_t(w):                     # (3H, Din) -> (Din, 3H) bf16
        return w.T.astype(bf16)

    w_ih0 = params["gru_w_ih_l0"]                          # (3H, KB + H)
    wu0_s = stacked_t(w_ih0[:, :KB])                       # (KB, 3H)
    wq0_s = stacked_t(w_ih0[:, KB:])                       # (H, 3H)
    whh0_s = stacked_t(params["gru_w_hh_l0"])              # (H, 3H)
    wih1_s = stacked_t(params["gru_w_ih_l1"])              # (H, 3H)
    whh1_s = stacked_t(params["gru_w_hh_l1"])              # (H, 3H)
    gru_w = jnp.stack([wq0_s, whh0_s, wih1_s, whh1_s], axis=0)   # (4, H, 3H)

    def comb_bias(bih, bhh):
        # fold b_hh into b_ih for r and z; keep b_hn separate (inside r* term)
        bc = bih + jnp.concatenate([bhh[:2 * H], jnp.zeros((H,), jnp.float32)])
        return bc.reshape(1, 3 * H), bhh[2 * H:].reshape(1, H)

    bc0, bhn0 = comb_bias(params["gru_b_ih_l0"], params["gru_b_hh_l0"])
    bc1, bhn1 = comb_bias(params["gru_b_ih_l1"], params["gru_b_hh_l1"])
    b_comb = jnp.stack([bc0, bc1], axis=0)                 # (L, 1, 3H) f32
    b_hn = jnp.stack([bhn0, bhn1], axis=0)                 # (L, 1, H)  f32

    # W2 stored un-transposed (kernel computes W2 @ s in the (H, B*KB) layout),
    # query_layer weight stored transposed (kernel computes h @ Wq^T).
    att_w = jnp.stack([params["w2"].astype(bf16),
                       params["query_w"].T.astype(bf16)], axis=0)   # (2, H, H)

    return {
        "key_w": params["key_w"],              # (H, DK) f32 (once-per-KB matmul)
        "wu0_s": wu0_s,
        "gru_w": gru_w,
        "b_comb": b_comb,
        "b_hn": b_hn,
        "att_w": att_w,
        "energy_w": params["energy_w"].astype(bf16),   # (1, H)
    }


# --------------------------- wrappers ----------------------------------------

def compute_proj_keys(keys, key_w):
    """key_layer(keys), emitted in the transposed (H, B*KB) layout."""
    keys_t = jnp.transpose(keys, (2, 0, 1)).reshape(DK, B * KB)   # (DK, B*KB)
    pk_t = pl.pallas_call(
        _key_proj_kernel,
        out_shape=jax.ShapeDtypeStruct((H, B * KB), jnp.float32),
        in_specs=[_VMEM, _VMEM],
        out_specs=_VMEM,
    )(keys_t, key_w)
    return pk_t                                                   # (H, B*KB)


def keyval_ret_att_forward(packed, query, prev_kb_utilities,
                           prev_kb_feed_hidden, proj_keys_t):
    """Single fused forward step. Returns (u_t, kb_feed_hidden, proj_query)."""
    q2 = query[:, 0, :]                               # (B, H)      free reshape
    u2 = prev_kb_utilities[:, 0, :]                   # (B, KB)     free reshape
    # Query broadcast along the key axis, transposed layout (H, B*KB); column
    # b*KB + k carries batch b.  Built once in the wrapper, nothing in-kernel.
    qbT = jnp.repeat(q2.T, KB, axis=1)                # (H, B*KB)

    u_flat, kb_feed_hidden, proj_query = pl.pallas_call(
        _fused_forward_kernel,
        out_shape=(
            jax.ShapeDtypeStruct((1, B * KB), jnp.float32),   # u_t (lane-dense)
            jax.ShapeDtypeStruct((L, B, H), jnp.float32),     # kb_feed_hidden
            jax.ShapeDtypeStruct((B, H), jnp.float32),        # proj_query
        ),
        in_specs=[_VMEM] * 11,
        out_specs=(_VMEM, _VMEM, _VMEM),
        input_output_aliases={2: 1},   # prev_kb_feed_hidden -> kb_feed_hidden
    )(q2, u2, prev_kb_feed_hidden, proj_keys_t, qbT,
      packed["wu0_s"], packed["gru_w"], packed["b_comb"], packed["b_hn"],
      packed["att_w"], packed["energy_w"])

    u_t = u_flat.reshape(B, 1, KB)
    return u_t, kb_feed_hidden, proj_query[:, None, :]


# --------------------------- reference (pure JAX) ----------------------------

def reference_forward(params, query, keys, prev_kb_utilities, prev_kb_feed_hidden):
    with jax.default_matmul_precision("highest"):
        proj_keys = jnp.einsum("bkd,hd->bkh", keys, params["key_w"])
        x = jnp.concatenate([prev_kb_utilities, query], axis=-1)[:, 0, :]
        hs = []
        for l in range(L):
            h = prev_kb_feed_hidden[l]
            gi = x @ params[f"gru_w_ih_l{l}"].T + params[f"gru_b_ih_l{l}"]
            gh = h @ params[f"gru_w_hh_l{l}"].T + params[f"gru_b_hh_l{l}"]
            i_r, i_z, i_n = jnp.split(gi, 3, axis=-1)
            h_r, h_z, h_n = jnp.split(gh, 3, axis=-1)
            r = jax.nn.sigmoid(i_r + h_r)
            z = jax.nn.sigmoid(i_z + h_z)
            n = jnp.tanh(i_n + r * h_n)
            x = (1.0 - z) * n + z * h
            hs.append(x)
        kb_feed_hidden = jnp.stack(hs, axis=0)
        proj_query = jnp.einsum("bh,oh->bo",
                                kb_feed_hidden[-1], params["query_w"])[:, None, :]
        after_w1 = jnp.tanh(query + proj_keys)
        after_w2 = jnp.tanh(jnp.einsum("bkh,oh->bko", after_w1, params["w2"]))
        u = jnp.einsum("bkh,oh->bko", after_w2, params["energy_w"])   # (B,KB,1)
        u_t = jnp.transpose(u, (0, 2, 1))                             # (B,1,KB)
        return u_t, kb_feed_hidden, proj_query, proj_keys


# --------------------------- setup / main -------------------------------------

def init_params(rng):
    ks = jax.random.split(rng, 4 + 4 * L)

    def w(k, shape, scale=0.2):
        return (scale * jax.random.normal(k, shape)).astype(jnp.float32)

    p = {
        "key_w": w(ks[0], (H, DK)),    # key_layer.weight    (out, in)
        "query_w": w(ks[1], (H, H)),   # query_layer.weight
        "energy_w": w(ks[2], (1, H)),  # energy_layer.weight
        "w2": w(ks[3], (H, H)),        # W2.weight
    }
    din = KB + H                       # memory_input_dim = kb_total + hidden
    for l in range(L):
        base = 4 + 4 * l
        p[f"gru_w_ih_l{l}"] = w(ks[base + 0], (3 * H, din))
        p[f"gru_w_hh_l{l}"] = w(ks[base + 1], (3 * H, H))
        p[f"gru_b_ih_l{l}"] = w(ks[base + 2], (3 * H,))
        p[f"gru_b_hh_l{l}"] = w(ks[base + 3], (3 * H,))
        din = H
    return p


if __name__ == "__main__":
    rng = jax.random.PRNGKey(0)
    p_rng, q_rng, k_rng, u_rng, h_rng = jax.random.split(rng, 5)
    params = init_params(p_rng)
    packed = pack_params(params)            # one-time pre-transpose / pre-pack

    query = jax.random.normal(q_rng, (B, 1, H), dtype=jnp.float32)
    keys = jax.random.normal(k_rng, (B, KB, DK), dtype=jnp.float32)
    prev_kb_utilities = jax.random.normal(u_rng, (B, 1, KB), dtype=jnp.float32)
    prev_kb_feed_hidden = jax.random.normal(h_rng, (L, B, H), dtype=jnp.float32)

    # compute_proj_keys (pre-computed once per KB, as in the PyTorch module)
    proj_keys_t = jax.jit(compute_proj_keys)(keys, packed["key_w"])   # (H, B*KB)

    # TODO(synk): if this forward is run in an autoregressive decode loop, wrap
    # the timestep loop in a single jitted lax.scan (or fold T into the grid)
    # so per-call dispatch overhead is amortized across steps.
    fwd = jax.jit(keyval_ret_att_forward)
    u_t, kb_feed_hidden, proj_query = fwd(
        packed, query, prev_kb_utilities, prev_kb_feed_hidden, proj_keys_t)
    jax.block_until_ready((u_t, kb_feed_hidden, proj_query))

    # sanity check vs pure-JAX reference (kernel feeds bf16 into the MXU but
    # accumulates f32, so tolerance is relaxed accordingly)
    ref_u, ref_h, ref_pq, ref_pk = reference_forward(
        params, query, keys, prev_kb_utilities, prev_kb_feed_hidden)
    proj_keys_bkh = jnp.transpose(proj_keys_t.reshape(H, B, KB), (1, 2, 0))
    assert u_t.shape == (B, 1, KB) and kb_feed_hidden.shape == (L, B, H)
    err = max(float(jnp.max(jnp.abs(u_t - ref_u))),
              float(jnp.max(jnp.abs(kb_feed_hidden - ref_h))),
              float(jnp.max(jnp.abs(proj_query - ref_pq))),
              float(jnp.max(jnp.abs(proj_keys_bkh - ref_pk))))
    if err > 5e-2:
        raise AssertionError(f"mismatch vs reference, max abs err = {err}")

    # TODO(synk): multihead_feed=True and pad_keys=True branches (disabled in
    # the default config) and inter-layer GRU dropout are not implemented.
    print("KERNEL_OK")
</pallas_src>

<mosaic_0001>
module attributes {stable_mosaic.version = 11 : i64} {
  func.func @_key_proj_kernel(%arg0: memref<16x128xf32, #tpu.memory_space<vmem>>, %arg1: memref<32x16xf32, #tpu.memory_space<vmem>>, %arg2: memref<32x128xf32, #tpu.memory_space<vmem>>) attributes {dimension_semantics = [], scalar_prefetch = 0 : i64, scratch_operands = 0 : i64, tpu.core_type = #tpu.core_type<tc>} {
    %c0 = arith.constant 0 : index
    %c0_0 = arith.constant 0 : index
    %0 = vector.load %arg1[%c0, %c0_0] : memref<32x16xf32, #tpu.memory_space<vmem>>, vector<32x16xf32>
    %c0_1 = arith.constant 0 : index
    %c0_2 = arith.constant 0 : index
    %1 = vector.load %arg0[%c0_1, %c0_2] : memref<16x128xf32, #tpu.memory_space<vmem>>, vector<16x128xf32>
    %cst = arith.constant dense<0.000000e+00> : vector<32x128xf32>
    %2 = tpu.matmul %0, %1, %cst {dimension_numbers = #tpu.dot_dimension_numbers<[1], [0], [0], [1], [0, 0, 1, 1], [], []>} : vector<32x16xf32>, vector<16x128xf32>, vector<32x128xf32> -> vector<32x128xf32>
    %c0_3 = arith.constant 0 : index
    %c0_4 = arith.constant 0 : index
    %3 = vector.load %arg2[%c0_3, %c0_4] : memref<32x128xf32, #tpu.memory_space<vmem>>, vector<32x128xf32>
    tpu.vector_store %arg2[%c0_3, %c0_4], %2 {strides = array<i32>} : memref<32x128xf32, #tpu.memory_space<vmem>>, vector<32x128xf32>,
    return
  }
}

</mosaic_0001>

<llo_original>
// kernel: compute_proj_keys.1
$region0: #{compute_proj_keys.1}
  #allocation0 [shape = 'u32[]', space=smem, size = 0x4, offset = 0x4, fixed_abs, tag = 'smem constant byte address 0x4 - core index']
  #allocation1 [shape = 'u32[144,128]{1,0:T(1,128)}', space=vmem, size = 0x12000, scoped, tag = 'internal scratch']
  %s0 = inlined_call_operand.vmem [shape: f32[16,128], index: 0, kind: input, shape index: {}]
  %s1 = inlined_call_operand.vmem [shape: f32[32,16], index: 1, kind: input, shape index: {}]
  %s2 = inlined_call_operand.hbm [shape: f32[32,128], index: 2, kind: output, shape index: {}]
  %s3 = sld [smem:[#allocation0]]
  $region18: #{compute_proj_keys.1} parent=0
    _
  %s5 = ssub.s32 1, %s3
  %s6 = scalar_select 0, %s5, %s3
  $region1: #{compute_proj_keys.1} parent=0
    #allocation2 [shape = 'u8[16384]{0}', space=vmem, size = 0x4000, scoped, tag = 'output window, operand 0, single buffered']
    #allocation3 [shape = 's32[1]{0}', space=sflag, size = 0x4, scoped, tag = 'scoped memory for compute_proj_keys.1']
    %7 = vsyncpa [#allocation3], 0
    // Predicated region
    $region2: #{compute_proj_keys.1} parent=1 // pred_check
      _
    $region3: #{compute_proj_keys.1} parent=1 // pred_check_branch
      %9 = sbr.rel (0) target = $region5
    $region4: #{compute_proj_keys.1} parent=1 // pred_region
      _
    $region5: #{compute_proj_keys.1} parent=1 // pred_fallthru
      _
    // Predicated region
    $region6: #{compute_proj_keys.1} parent=1 // pred_check
      _
    $region7: #{compute_proj_keys.1} parent=1 // pred_check_branch
      %11 = sbr.rel (0) target = $region9
    $region8: #{compute_proj_keys.1} parent=1 // pred_region
      _
    $region9: #{compute_proj_keys.1} parent=1 // pred_fallthru
      _
    %v12 = vld [vmem:[%s1] sm:$0xff]
    %v13 = vld [vmem:[%s1 + $0x8] sm:$0xff]
    %v14 = vld [vmem:[%s1 + $0x10] sm:$0xff]
    %v15 = vld [vmem:[%s1 + $0x18] sm:$0xff]
    %v16 = vld [vmem:[%s0] sm:$0xff]
    %v17 = vld [vmem:[%s0 + $0x8] sm:$0xff]
    %vm18 = vcmask 130048
    %v20 = vsel %vm18, %v12, 0
    %v23 = vsel %vm18, %v13, 0
    %v26 = vsel %vm18, %v14, 0
    %v29 = vsel %vm18, %v15, 0
    %31 = vmatprep.subr.mxu0 0.0
    %32 = vmatpush1.msra.mxu0 %v16
    %33 = vmatprep.subr.mxu0 0.0
    %34 = vmatpush1.msra.mxu0 %v17
    %35 = vmatprep.subr.mxu0 0.0
    %36 = vmatpush1.msra.mxu0 0.0
    %37 = vmatprep.subr.mxu0 0.0
    %38 = vmatpush1.msra.mxu0 0.0
    %39 = vmatprep.subr.mxu0 0.0
    %40 = vmatpush1.msra.mxu0 0.0
    %41 = vmatprep.subr.mxu0 0.0
    %42 = vmatpush1.msra.mxu0 0.0
    %43 = vmatprep.subr.mxu0 0.0
    %44 = vmatpush1.msra.mxu0 0.0
    %45 = vmatprep.subr.mxu0 0.0
    %46 = vmatpush1.msra.mxu0 0.0
    %47 = vmatprep.subr.mxu0 0.0
    %48 = vmatpush1.msra.mxu0 0.0
    %49 = vmatprep.subr.mxu0 0.0
    %50 = vmatpush1.msra.mxu0 0.0
    %51 = vmatprep.subr.mxu0 0.0
    %52 = vmatpush1.msra.mxu0 0.0
    %53 = vmatprep.subr.mxu0 0.0
    %54 = vmatpush1.msra.mxu0 0.0
    %55 = vmatprep.subr.mxu0 0.0
    %56 = vmatpush1.msra.mxu0 0.0
    %57 = vmatprep.subr.mxu0 0.0
    %58 = vmatpush1.msra.mxu0 0.0
    %59 = vmatprep.subr.mxu0 0.0
    %60 = vmatpush1.msra.mxu0 0.0
    %61 = vmatprep.subr.mxu0 0.0
    %62 = vmatpush1.msra.mxu0 0.0
    %63 = vmatprep.subr.mxu0 0.0
    %64 = vmatpush1.msra.mxu0 0.0
    %65 = vmatprep.subr.mxu0 0.0
    %66 = vmatpush1.msra.mxu0 0.0
    %67 = vmatprep.subr.mxu0 0.0
    %68 = vmatpush1.msra.mxu0 0.0
    %69 = vmatprep.subr.mxu0 0.0
    %70 = vmatpush1.msra.mxu0 0.0
    %71 = vmatprep.subr.mxu0 0.0
    %72 = vmatpush1.msra.mxu0 0.0
    %73 = vmatprep.subr.mxu0 0.0
    %74 = vmatpush1.msra.mxu0 0.0
    %75 = vmatprep.subr.mxu0 0.0
    %76 = vmatpush1.msra.mxu0 0.0
    %77 = vmatprep.subr.mxu0 0.0
    %78 = vmatpush1.msra.mxu0 0.0
    %79 = vmatprep.subr.mxu0 0.0
    %80 = vmatpush1.msra.mxu0 0.0
    %81 = vmatprep.subr.mxu0 0.0
    %82 = vmatpush1.msra.mxu0 0.0
    %83 = vmatprep.subr.mxu0 0.0
    %84 = vmatpush1.msra.mxu0 0.0
    %85 = vmatprep.subr.mxu0 0.0
    %86 = vmatpush1.msra.mxu0 0.0
    %87 = vmatprep.subr.mxu0 0.0
    %88 = vmatpush1.msra.mxu0 0.0
    %89 = vmatprep.subr.mxu0 0.0
    %90 = vmatpush1.msra.mxu0 0.0
    %91 = vmatprep.subr.mxu0 0.0
    %92 = vmatpush1.msra.mxu0 0.0
    %93 = vmatprep.subr.mxu0 0.0
    %94 = vmatpush1.msra.mxu0 0.0
    %95 = vmatprep.mubr.f32.mxu0 0.0
    %96 = vmatmul.mubr.f32.gmra.mrb[0].mxu0 %v20
    %v97 = vpop.f32.mrb[0].mxu0
    %v98 = vadd.f32 0.0, %v97
    %v99 = vpop.f32.mrb[0].mxu0
    %100 = vmatprep.mubr.f32.mxu0 0.0
    %101 = vmatmul.mubr.f32.gmra.mrb[0].mxu0 %v23
    %v102 = vpop.f32.mrb[0].mxu0
    %v103 = vadd.f32 0.0, %v102
    %v104 = vpop.f32.mrb[0].mxu0
    %105 = vmatprep.mubr.f32.mxu0 0.0
    %106 = vmatmul.mubr.f32.gmra.mrb[0].mxu0 %v26
    %v107 = vpop.f32.mrb[0].mxu0
    %v108 = vadd.f32 0.0, %v107
    %v109 = vpop.f32.mrb[0].mxu0
    %110 = vmatprep.mubr.f32.mxu0 0.0
    %111 = vmatmul.mubr.f32.gmra.mrb[0].mxu0 %v29
    %v112 = vpop.f32.mrb[0].mxu0
    %v113 = vadd.f32 0.0, %v112
    %v114 = vpop.f32.mrb[0].mxu0
    %115 = vdwg.mxu0
    %116 = vst [vmem:[#allocation2] sm:$0xff] %v98
    %117 = vst [vmem:[#allocation2 + $0x8] sm:$0xff] %v103
    %118 = vst [vmem:[#allocation2 + $0x10] sm:$0xff] %v108
    %119 = vst [vmem:[#allocation2 + $0x18] sm:$0xff] %v113
    // Predicated region
    $region10: #{compute_proj_keys.1} parent=1 // pred_check
      _
    $region11: #{compute_proj_keys.1} parent=1 // pred_check_branch
      %121 = sbr.rel (0) target = $region13
    $region12: #{compute_proj_keys.1} parent=1 // pred_region
      %s123 = ssub.s32 512, 512
      %124 = vsyncadd [#allocation3], %s123
      %s125 = sshll.u32 [#allocation2], 4
      %s126 = int_to_ptr.vmem [resolvable:$true] %s125
      %131 = dma.vmem_to_hbm [thread:$0]  %s126, 512, %s2, [#allocation3], 128, 128, 8
    $region13: #{compute_proj_keys.1} parent=1 // pred_fallthru
      _
    // Predicated region
    $region14: #{compute_proj_keys.1} parent=1 // pred_check
      _
    $region15: #{compute_proj_keys.1} parent=1 // pred_check_branch
      %133 = sbr.rel (0) target = $region17
    $region16: #{compute_proj_keys.1} parent=1 // pred_region
      %134 = dma.done [#allocation3], 512
    $region17: #{compute_proj_keys.1} parent=1 // pred_fallthru
      _
    %135 = vsyncpa [#allocation3], 1

</llo_original>
